<compile_context>
chip_gen: v6e
topology: v6e:2x2x1
jax: 0.10.0
libtpu: 0.0.40
codegen_flags: <defaults>
</compile_context>

<pallas_src>
import jax
import jax.numpy as jnp
from jax.experimental import pallas as pl
from jax.experimental.pallas import tpu as pltpu


def _round_up(x: int, m: int) -> int:
    return ((x + m - 1) // m) * m


def _cdiv(a: int, b: int) -> int:
    return (a + b - 1) // b


# ---------------------------------------------------------------------------
# Pallas kernel: fused  concat + Linear -> ReLU -> Linear  classification head
# ---------------------------------------------------------------------------
def clip_head_kernel(img_ref, txt_ref, w1i_ref, w1t_ref, b1_ref, w2_ref,
                     b2_ref, out_ref):
    # img/txt: (TB, Dp) bf16   w1i/w1t: (Dp, Hp) bf16   b1: (1, Hp) f32
    # w2:      (Hp, Op) bf16   b2:      (1, Op) f32     out: (TB, Op)
    #
    # cat([img, txt], 1) @ W1 == img @ W1[:D] + txt @ W1[D:]   (f32 MXU accum)
    h = jnp.dot(img_ref[...], w1i_ref[...], preferred_element_type=jnp.float32)
    h = h + jnp.dot(txt_ref[...], w1t_ref[...],
                    preferred_element_type=jnp.float32)
    h = jnp.maximum(h + b1_ref[...], 0.0)                 # bias + ReLU in f32

    o = jnp.dot(h.astype(w2_ref.dtype), w2_ref[...],
                preferred_element_type=jnp.float32)
    out_ref[...] = (o + b2_ref[...]).astype(out_ref.dtype)


# ---------------------------------------------------------------------------
# One-time (model-init) head-parameter relayout: bf16, 128-padded, W1 split.
# ---------------------------------------------------------------------------
def prepare_clip_head_params(w1, b1, w2, b2):
    """w1: (2D, H), b1: (H,), w2: (H, O), b2: (O,) -> kernel-ready params."""
    two_d, H = w1.shape
    assert two_d % 2 == 0
    D = two_d // 2
    O = w2.shape[1]
    Dp, Hp, Op = _round_up(D, 128), _round_up(H, 128), _round_up(O, 128)

    def pad2_bf16(x, rows, cols):
        x = x.astype(jnp.bfloat16)
        return jnp.pad(x, ((0, rows - x.shape[0]), (0, cols - x.shape[1])))

    return dict(
        w1_img=pad2_bf16(w1[:D], Dp, Hp),       # (Dp, Hp)
        w1_txt=pad2_bf16(w1[D:], Dp, Hp),       # (Dp, Hp)
        b1=jnp.pad(b1.astype(jnp.float32), (0, Hp - H)).reshape(1, Hp),
        w2=pad2_bf16(w2, Hp, Op),               # (Hp, Op)
        b2=jnp.pad(b2.astype(jnp.float32), (0, Op - O)).reshape(1, Op),
        D=D, H=H, O=O,
    )


# ---------------------------------------------------------------------------
# Tiling / VMEM sizing helpers
# ---------------------------------------------------------------------------
def _select_batch_tiling(B: int, tb_max: int = 512):
    """Batch tile: multiple of 16, tight against B, >=2 grid steps if possible."""
    Bp = _round_up(B, 16)                       # bf16 packs 16 sublanes / vreg
    n_tiles = _cdiv(Bp, tb_max)
    if n_tiles == 1 and Bp >= 32:
        n_tiles = 2                             # keep both v7x TensorCores busy
    TB = _round_up(_cdiv(Bp, n_tiles), 16)
    grid_b = _cdiv(Bp, TB)
    return TB, TB * grid_b, grid_b


def _vmem_limit_bytes(TB, Dp, Hp, Op, out_itemsize):
    weights = 2 * Dp * Hp * 2 + Hp * Op * 2     # bf16, single-buffered
    biases = 2 * (8 * Hp + 8 * Op) * 4          # f32, generous sublane padding
    acts = 2 * 2 * TB * Dp * 2                  # 2 inputs x double buffer, bf16
    outs = 2 * TB * Op * out_itemsize           # double-buffered output
    need = weights + biases + acts + outs
    # 2x + margin for Mosaic internal scratch; never the full 64 MiB of v7x.
    return min(max(2 * need + (4 << 20), 16 << 20), 48 << 20)


# ---------------------------------------------------------------------------
# Host wrapper
# ---------------------------------------------------------------------------
def clip_head_pallas(img_feat, txt_feat, params, out_dtype=jnp.float32):
    """Head MLP on concatenated [img_feat, txt_feat].

    img_feat/txt_feat: (B, D) float; params from prepare_clip_head_params().
    Returns (B, O) in out_dtype (f32 default; bf16 halves writeback on v5e).
    """
    B, D = img_feat.shape
    assert txt_feat.shape == (B, D) and params["D"] == D
    O = params["O"]
    Dp, Hp = params["w1_img"].shape
    Op = params["w2"].shape[1]

    TB, Bp, grid_b = _select_batch_tiling(B)

    def prep_act(x):
        # Single bf16 cast; in production the encoder would emit bf16 directly.
        x = x.astype(jnp.bfloat16)
        pad_rows, pad_cols = Bp - B, Dp - D     # pad_cols == 0 for CLIP D=512/768
        if pad_rows or pad_cols:
            x = jnp.pad(x, ((0, pad_rows), (0, pad_cols)))
        return x

    img_p = prep_act(img_feat)
    txt_p = prep_act(txt_feat)

    vmem_limit = _vmem_limit_bytes(TB, Dp, Hp, Op, jnp.dtype(out_dtype).itemsize)

    act_spec = pl.BlockSpec((TB, Dp), lambda i: (i, 0))
    out_spec = pl.BlockSpec((TB, Op), lambda i: (i, 0))

    def build_call(single_buffer_weights: bool):
        res_kw = ({"pipeline_mode": pl.Buffered(1)}
                  if single_buffer_weights else {})
        resident = lambda shape: pl.BlockSpec(shape, lambda i: (0, 0), **res_kw)
        return pl.pallas_call(
            clip_head_kernel,
            out_shape=jax.ShapeDtypeStruct((Bp, Op), out_dtype),
            grid=(grid_b,),
            in_specs=[
                act_spec,                 # img features  (tiled over batch)
                act_spec,                 # text features (tiled over batch)
                resident((Dp, Hp)),       # W1 img-half  (resident)
                resident((Dp, Hp)),       # W1 txt-half  (resident)
                resident((1, Hp)),        # b1
                resident((Hp, Op)),       # W2
                resident((1, Op)),        # b2
            ],
            out_specs=out_spec,
            compiler_params=pltpu.CompilerParams(
                dimension_semantics=("parallel",),
                vmem_limit_bytes=vmem_limit,
            ),
        )

    args = (img_p, txt_p, params["w1_img"], params["w1_txt"],
            params["b1"], params["w2"], params["b2"])
    try:
        out = build_call(True)(*args)
    except Exception:
        # Installed jax rejects BlockSpec.pipeline_mode -> default buffering.
        out = build_call(False)(*args)

    return out[:B, :O]


# ---------------------------------------------------------------------------
# Deterministic CLIP-encoder stubs (glue, plain JAX)
# TODO(synk): the real CLIP image/text transformer encoders are external
# submodules with no definition here; replaced by deterministic linear /
# embedding-mean stubs that produce D-dim features.
# ---------------------------------------------------------------------------
def encode_image_stub(image_nchw, w_img):
    B = image_nchw.shape[0]
    flat = image_nchw.reshape(B, -1).astype(jnp.float32)      # (B, C*H*W)
    return flat @ w_img                                        # (B, D)


def encode_text_stub(text_tokens, embed_table):
    emb = embed_table[text_tokens]                             # (B, S, D)
    return jnp.mean(emb, axis=1)                               # (B, D)


# ---------------------------------------------------------------------------
# Pure-JAX reference (f32 math on the same bf16-quantized operands)
# ---------------------------------------------------------------------------
def head_ref(img_feat, txt_feat, w1, b1, w2, b2):
    feats = jnp.concatenate([img_feat, txt_feat], axis=1)
    h = jnp.maximum(feats @ w1 + b1, 0.0)
    return h @ w2 + b2


if __name__ == "__main__":
    # Small shapes consistent with the module's forward.
    B = 2            # batch
    C, HH, WW = 3, 16, 16
    D = 32           # clip embed dim (ln_final.normalized_shape[0])
    HID = 32         # head_hidden_size
    OUT = 8          # output_size
    SEQ = 8          # text sequence length
    VOCAB = 64

    key = jax.random.PRNGKey(0)
    k_img, k_txt, k_wimg, k_emb, k_w1, k_b1, k_w2, k_b2 = jax.random.split(key, 8)

    # Inputs (image is NCHW like PyTorch).
    image = jax.random.normal(k_img, (B, C, HH, WW), dtype=jnp.float32)
    text = jax.random.randint(k_txt, (B, SEQ), 0, VOCAB, dtype=jnp.int32)

    # Deterministic parameters.
    w_img = jax.random.normal(k_wimg, (C * HH * WW, D), dtype=jnp.float32) * 0.02
    embed_table = jax.random.normal(k_emb, (VOCAB, D), dtype=jnp.float32) * 0.02
    w1 = jax.random.normal(k_w1, (2 * D, HID), dtype=jnp.float32) * 0.1
    b1 = jax.random.normal(k_b1, (HID,), dtype=jnp.float32) * 0.1
    w2 = jax.random.normal(k_w2, (HID, OUT), dtype=jnp.float32) * 0.1
    b2 = jax.random.normal(k_b2, (OUT,), dtype=jnp.float32) * 0.1

    # One-time head-parameter relayout (model-init time, not per call).
    head_params = prepare_clip_head_params(w1, b1, w2, b2)

    # Forward pass (use_img_encoder=True, use_text_encoder=True).
    img_feat = encode_image_stub(image, w_img).astype(jnp.float32)     # .float()
    txt_feat = encode_text_stub(text, embed_table).astype(jnp.float32)

    out = clip_head_pallas(img_feat, txt_feat, head_params)
    out = jax.block_until_ready(out)
    assert out.shape == (B, OUT)

    # Reference on the same bf16-rounded operands (kernel accumulates in f32).
    q = lambda a: a.astype(jnp.bfloat16).astype(jnp.float32)
    ref = head_ref(q(img_feat), q(txt_feat), q(w1), b1, q(w2), b2)
    assert jnp.allclose(out, ref, atol=2e-2, rtol=2e-2), "mismatch vs reference"

    print("KERNEL_OK")
</pallas_src>

<mosaic_0001>
module attributes {stable_mosaic.version = 11 : i64} {
  func.func @clip_head_kernel(%arg0: i32, %arg1: memref<16x128xbf16, #tpu.memory_space<vmem>>, %arg2: memref<16x128xbf16, #tpu.memory_space<vmem>>, %arg3: memref<128x128xbf16, #tpu.memory_space<vmem>>, %arg4: memref<128x128xbf16, #tpu.memory_space<vmem>>, %arg5: memref<1x128xf32, #tpu.memory_space<vmem>>, %arg6: memref<128x128xbf16, #tpu.memory_space<vmem>>, %arg7: memref<1x128xf32, #tpu.memory_space<vmem>>, %arg8: memref<16x128xf32, #tpu.memory_space<vmem>>) attributes {dimension_semantics = [#tpu.dimension_semantics<parallel>], iteration_bounds = array<i64: 1>, scalar_prefetch = 0 : i64, scratch_operands = 0 : i64, tpu.core_type = #tpu.core_type<tc>, window_params = [{transform_indices = @transform_0, window_bounds = array<i64: 16, 128>}, {transform_indices = @transform_1, window_bounds = array<i64: 16, 128>}, {pipeline_mode = #tpu.pipeline_mode<synchronous>, transform_indices = @transform_2, window_bounds = array<i64: 128, 128>}, {pipeline_mode = #tpu.pipeline_mode<synchronous>, transform_indices = @transform_3, window_bounds = array<i64: 128, 128>}, {pipeline_mode = #tpu.pipeline_mode<synchronous>, transform_indices = @transform_4, window_bounds = array<i64: 1, 128>}, {pipeline_mode = #tpu.pipeline_mode<synchronous>, transform_indices = @transform_5, window_bounds = array<i64: 128, 128>}, {pipeline_mode = #tpu.pipeline_mode<synchronous>, transform_indices = @transform_6, window_bounds = array<i64: 1, 128>}, {transform_indices = @transform_7, window_bounds = array<i64: 16, 128>}]} {
    %c0 = arith.constant 0 : index
    %c0_0 = arith.constant 0 : index
    %0 = vector.load %arg1[%c0, %c0_0] : memref<16x128xbf16, #tpu.memory_space<vmem>>, vector<16x128xbf16>
    %c0_1 = arith.constant 0 : index
    %c0_2 = arith.constant 0 : index
    %1 = vector.load %arg3[%c0_1, %c0_2] : memref<128x128xbf16, #tpu.memory_space<vmem>>, vector<128x128xbf16>
    %cst = arith.constant dense<0.000000e+00> : vector<16x128xf32>
    %2 = tpu.matmul %0, %1, %cst {dimension_numbers = #tpu.dot_dimension_numbers<[1], [0], [0], [1], [0, 0, 1, 1], [], []>} : vector<16x128xbf16>, vector<128x128xbf16>, vector<16x128xf32> -> vector<16x128xf32>
    %c0_3 = arith.constant 0 : index
    %c0_4 = arith.constant 0 : index
    %3 = vector.load %arg2[%c0_3, %c0_4] : memref<16x128xbf16, #tpu.memory_space<vmem>>, vector<16x128xbf16>
    %c0_5 = arith.constant 0 : index
    %c0_6 = arith.constant 0 : index
    %4 = vector.load %arg4[%c0_5, %c0_6] : memref<128x128xbf16, #tpu.memory_space<vmem>>, vector<128x128xbf16>
    %cst_7 = arith.constant dense<0.000000e+00> : vector<16x128xf32>
    %5 = tpu.matmul %3, %4, %cst_7 {dimension_numbers = #tpu.dot_dimension_numbers<[1], [0], [0], [1], [0, 0, 1, 1], [], []>} : vector<16x128xbf16>, vector<128x128xbf16>, vector<16x128xf32> -> vector<16x128xf32>
    %6 = arith.addf %2, %5 : vector<16x128xf32>
    %c0_8 = arith.constant 0 : index
    %c0_9 = arith.constant 0 : index
    %7 = vector.load %arg5[%c0_8, %c0_9] : memref<1x128xf32, #tpu.memory_space<vmem>>, vector<1x128xf32>
    %8 = vector.broadcast %7 : vector<1x128xf32> to vector<16x128xf32>
    %9 = arith.addf %6, %8 : vector<16x128xf32>
    %cst_10 = arith.constant 0.000000e+00 : f32
    %10 = vector.broadcast %cst_10 : f32 to vector<16x128xf32>
    %11 = arith.maximumf %9, %10 : vector<16x128xf32>
    %12 = arith.truncf %11 : vector<16x128xf32> to vector<16x128xbf16>
    %c0_11 = arith.constant 0 : index
    %c0_12 = arith.constant 0 : index
    %13 = vector.load %arg6[%c0_11, %c0_12] : memref<128x128xbf16, #tpu.memory_space<vmem>>, vector<128x128xbf16>
    %cst_13 = arith.constant dense<0.000000e+00> : vector<16x128xf32>
    %14 = tpu.matmul %12, %13, %cst_13 {dimension_numbers = #tpu.dot_dimension_numbers<[1], [0], [0], [1], [0, 0, 1, 1], [], []>} : vector<16x128xbf16>, vector<128x128xbf16>, vector<16x128xf32> -> vector<16x128xf32>
    %c0_14 = arith.constant 0 : index
    %c0_15 = arith.constant 0 : index
    %15 = vector.load %arg7[%c0_14, %c0_15] : memref<1x128xf32, #tpu.memory_space<vmem>>, vector<1x128xf32>
    %16 = vector.broadcast %15 : vector<1x128xf32> to vector<16x128xf32>
    %17 = arith.addf %14, %16 : vector<16x128xf32>
    %c0_16 = arith.constant 0 : index
    %c0_17 = arith.constant 0 : index
    %18 = vector.load %arg8[%c0_16, %c0_17] : memref<16x128xf32, #tpu.memory_space<vmem>>, vector<16x128xf32>
    tpu.vector_store %arg8[%c0_16, %c0_17], %17 {strides = array<i32>} : memref<16x128xf32, #tpu.memory_space<vmem>>, vector<16x128xf32>,
    return
  }
  func.func @transform_0(%arg0: i32) -> (i32, i32) {
    %c0_i32 = arith.constant 0 : i32
    %c0_i32_0 = arith.constant 0 : i32
    return %arg0, %c0_i32 : i32, i32
  }
  func.func @transform_1(%arg0: i32) -> (i32, i32) {
    %c0_i32 = arith.constant 0 : i32
    %c0_i32_0 = arith.constant 0 : i32
    return %arg0, %c0_i32 : i32, i32
  }
  func.func @transform_2(%arg0: i32) -> (i32, i32) {
    %c0_i32 = arith.constant 0 : i32
    %c0_i32_0 = arith.constant 0 : i32
    %c0_i32_1 = arith.constant 0 : i32
    return %c0_i32, %c0_i32_0 : i32, i32
  }
  func.func @transform_3(%arg0: i32) -> (i32, i32) {
    %c0_i32 = arith.constant 0 : i32
    %c0_i32_0 = arith.constant 0 : i32
    %c0_i32_1 = arith.constant 0 : i32
    return %c0_i32, %c0_i32_0 : i32, i32
  }
  func.func @transform_4(%arg0: i32) -> (i32, i32) {
    %c0_i32 = arith.constant 0 : i32
    %c0_i32_0 = arith.constant 0 : i32
    %c0_i32_1 = arith.constant 0 : i32
    return %c0_i32, %c0_i32_0 : i32, i32
  }
  func.func @transform_5(%arg0: i32) -> (i32, i32) {
    %c0_i32 = arith.constant 0 : i32
    %c0_i32_0 = arith.constant 0 : i32
    %c0_i32_1 = arith.constant 0 : i32
    return %c0_i32, %c0_i32_0 : i32, i32
  }
  func.func @transform_6(%arg0: i32) -> (i32, i32) {
    %c0_i32 = arith.constant 0 : i32
    %c0_i32_0 = arith.constant 0 : i32
    %c0_i32_1 = arith.constant 0 : i32
    return %c0_i32, %c0_i32_0 : i32, i32
  }
  func.func @transform_7(%arg0: i32) -> (i32, i32) {
    %c0_i32 = arith.constant 0 : i32
    %c0_i32_0 = arith.constant 0 : i32
    return %arg0, %c0_i32 : i32, i32
  }
}

module attributes {stable_mosaic.version = 11 : i64} {
  func.func @clip_head_kernel(%arg0: i32, %arg1: memref<16x128xbf16, #tpu.memory_space<vmem>>, %arg2: memref<16x128xbf16, #tpu.memory_space<vmem>>, %arg3: memref<128x128xbf16, #tpu.memory_space<vmem>>, %arg4: memref<128x128xbf16, #tpu.memory_space<vmem>>, %arg5: memref<1x128xf32, #tpu.memory_space<vmem>>, %arg6: memref<128x128xbf16, #tpu.memory_space<vmem>>, %arg7: memref<1x128xf32, #tpu.memory_space<vmem>>, %arg8: memref<16x128xf32, #tpu.memory_space<vmem>>) attributes {dimension_semantics = [#tpu.dimension_semantics<parallel>], iteration_bounds = array<i64: 1>, scalar_prefetch = 0 : i64, scratch_operands = 0 : i64, tpu.core_type = #tpu.core_type<tc>, window_params = [{transform_indices = @transform_0, window_bounds = array<i64: 16, 128>}, {transform_indices = @transform_1, window_bounds = array<i64: 16, 128>}, {pipeline_mode = #tpu.pipeline_mode<synchronous>, transform_indices = @transform_2, window_bounds = array<i64: 128, 128>}, {pipeline_mode = #tpu.pipeline_mode<synchronous>, transform_indices = @transform_3, window_bounds = array<i64: 128, 128>}, {pipeline_mode = #tpu.pipeline_mode<synchronous>, transform_indices = @transform_4, window_bounds = array<i64: 1, 128>}, {pipeline_mode = #tpu.pipeline_mode<synchronous>, transform_indices = @transform_5, window_bounds = array<i64: 128, 128>}, {pipeline_mode = #tpu.pipeline_mode<synchronous>, transform_indices = @transform_6, window_bounds = array<i64: 1, 128>}, {transform_indices = @transform_7, window_bounds = array<i64: 16, 128>}]} {
    %c0 = arith.constant 0 : index
    %c0_0 = arith.constant 0 : index
    %0 = vector.load %arg1[%c0, %c0_0] : memref<16x128xbf16, #tpu.memory_space<vmem>>, vector<16x128xbf16>
    %c0_1 = arith.constant 0 : index
    %c0_2 = arith.constant 0 : index
    %1 = vector.load %arg3[%c0_1, %c0_2] : memref<128x128xbf16, #tpu.memory_space<vmem>>, vector<128x128xbf16>
    %cst = arith.constant dense<0.000000e+00> : vector<16x128xf32>
    %2 = tpu.matmul %0, %1, %cst {dimension_numbers = #tpu.dot_dimension_numbers<[1], [0], [0], [1], [0, 0, 1, 1], [], []>} : vector<16x128xbf16>, vector<128x128xbf16>, vector<16x128xf32> -> vector<16x128xf32>
    %c0_3 = arith.constant 0 : index
    %c0_4 = arith.constant 0 : index
    %3 = vector.load %arg2[%c0_3, %c0_4] : memref<16x128xbf16, #tpu.memory_space<vmem>>, vector<16x128xbf16>
    %c0_5 = arith.constant 0 : index
    %c0_6 = arith.constant 0 : index
    %4 = vector.load %arg4[%c0_5, %c0_6] : memref<128x128xbf16, #tpu.memory_space<vmem>>, vector<128x128xbf16>
    %cst_7 = arith.constant dense<0.000000e+00> : vector<16x128xf32>
    %5 = tpu.matmul %3, %4, %cst_7 {dimension_numbers = #tpu.dot_dimension_numbers<[1], [0], [0], [1], [0, 0, 1, 1], [], []>} : vector<16x128xbf16>, vector<128x128xbf16>, vector<16x128xf32> -> vector<16x128xf32>
    %6 = arith.addf %2, %5 : vector<16x128xf32>
    %c0_8 = arith.constant 0 : index
    %c0_9 = arith.constant 0 : index
    %7 = vector.load %arg5[%c0_8, %c0_9] : memref<1x128xf32, #tpu.memory_space<vmem>>, vector<1x128xf32>
    %8 = vector.broadcast %7 : vector<1x128xf32> to vector<16x128xf32>
    %9 = arith.addf %6, %8 : vector<16x128xf32>
    %cst_10 = arith.constant 0.000000e+00 : f32
    %10 = vector.broadcast %cst_10 : f32 to vector<16x128xf32>
    %11 = arith.maximumf %9, %10 : vector<16x128xf32>
    %12 = arith.truncf %11 : vector<16x128xf32> to vector<16x128xbf16>
    %c0_11 = arith.constant 0 : index
    %c0_12 = arith.constant 0 : index
    %13 = vector.load %arg6[%c0_11, %c0_12] : memref<128x128xbf16, #tpu.memory_space<vmem>>, vector<128x128xbf16>
    %cst_13 = arith.constant dense<0.000000e+00> : vector<16x128xf32>
    %14 = tpu.matmul %12, %13, %cst_13 {dimension_numbers = #tpu.dot_dimension_numbers<[1], [0], [0], [1], [0, 0, 1, 1], [], []>} : vector<16x128xbf16>, vector<128x128xbf16>, vector<16x128xf32> -> vector<16x128xf32>
    %c0_14 = arith.constant 0 : index
    %c0_15 = arith.constant 0 : index
    %15 = vector.load %arg7[%c0_14, %c0_15] : memref<1x128xf32, #tpu.memory_space<vmem>>, vector<1x128xf32>
    %16 = vector.broadcast %15 : vector<1x128xf32> to vector<16x128xf32>
    %17 = arith.addf %14, %16 : vector<16x128xf32>
    %c0_16 = arith.constant 0 : index
    %c0_17 = arith.constant 0 : index
    %18 = vector.load %arg8[%c0_16, %c0_17] : memref<16x128xf32, #tpu.memory_space<vmem>>, vector<16x128xf32>
    tpu.vector_store %arg8[%c0_16, %c0_17], %17 {strides = array<i32>} : memref<16x128xf32, #tpu.memory_space<vmem>>, vector<16x128xf32>,
    return
  }
  func.func @transform_0(%arg0: i32) -> (i32, i32) {
    %c0_i32 = arith.constant 0 : i32
    %c0_i32_0 = arith.constant 0 : i32
    return %arg0, %c0_i32 : i32, i32
  }
  func.func @transform_1(%arg0: i32) -> (i32, i32) {
    %c0_i32 = arith.constant 0 : i32
    %c0_i32_0 = arith.constant 0 : i32
    return %arg0, %c0_i32 : i32, i32
  }
  func.func @transform_2(%arg0: i32) -> (i32, i32) {
    %c0_i32 = arith.constant 0 : i32
    %c0_i32_0 = arith.constant 0 : i32
    %c0_i32_1 = arith.constant 0 : i32
    return %c0_i32, %c0_i32_0 : i32, i32
  }
  func.func @transform_3(%arg0: i32) -> (i32, i32) {
    %c0_i32 = arith.constant 0 : i32
    %c0_i32_0 = arith.constant 0 : i32
    %c0_i32_1 = arith.constant 0 : i32
    return %c0_i32, %c0_i32_0 : i32, i32
  }
  func.func @transform_4(%arg0: i32) -> (i32, i32) {
    %c0_i32 = arith.constant 0 : i32
    %c0_i32_0 = arith.constant 0 : i32
    %c0_i32_1 = arith.constant 0 : i32
    return %c0_i32, %c0_i32_0 : i32, i32
  }
  func.func @transform_5(%arg0: i32) -> (i32, i32) {
    %c0_i32 = arith.constant 0 : i32
    %c0_i32_0 = arith.constant 0 : i32
    %c0_i32_1 = arith.constant 0 : i32
    return %c0_i32, %c0_i32_0 : i32, i32
  }
  func.func @transform_6(%arg0: i32) -> (i32, i32) {
    %c0_i32 = arith.constant 0 : i32
    %c0_i32_0 = arith.constant 0 : i32
    %c0_i32_1 = arith.constant 0 : i32
    return %c0_i32, %c0_i32_0 : i32, i32
  }
  func.func @transform_7(%arg0: i32) -> (i32, i32) {
    %c0_i32 = arith.constant 0 : i32
    %c0_i32_0 = arith.constant 0 : i32
    return %arg0, %c0_i32 : i32, i32
  }
}

</mosaic_0001>

<llo_original>
// kernel: tpu_custom_call.1
$region0: #{tpu_custom_call.1}
  #allocation0 [shape = 'u32[]', space=smem, size = 0x4, offset = 0x4, fixed_abs, tag = 'smem constant byte address 0x4 - core index']
  #allocation1 [shape = 'u32[144,128]{1,0:T(1,128)}', space=vmem, size = 0x12000, scoped, tag = 'internal scratch']
  %s0 = inlined_call_operand.hbm [shape: bf16[16,128], index: 0, kind: input, shape index: {}]
  %s1 = inlined_call_operand.hbm [shape: bf16[16,128], index: 1, kind: input, shape index: {}]
  %s2 = inlined_call_operand.hbm [shape: bf16[128,128], index: 2, kind: input, shape index: {}]
  %s3 = inlined_call_operand.hbm [shape: bf16[128,128], index: 3, kind: input, shape index: {}]
  %s4 = inlined_call_operand.vmem [shape: f32[1,128], index: 4, kind: input, shape index: {}]
  %s5 = inlined_call_operand.hbm [shape: bf16[128,128], index: 5, kind: input, shape index: {}]
  %s6 = inlined_call_operand.vmem [shape: f32[1,128], index: 6, kind: input, shape index: {}]
  %s7 = inlined_call_operand.hbm [shape: f32[16,128], index: 7, kind: output, shape index: {}]
  %s8 = sld [smem:[#allocation0]]
  $region58: #{tpu_custom_call.1} parent=0
    _
  %s10 = ssub.s32 1, %s8
  %s11 = scalar_select 0, %s10, %s8
  $region1: #{tpu_custom_call.1} parent=0
    #allocation2 [shape = 'u8[4096]{0}', space=vmem, size = 0x1000, scoped, tag = 'input window, operand 0, single buffered']
    #allocation3 [shape = 's32[1]{0}', space=sflag, size = 0x4, scoped, tag = 'scoped memory for tpu_custom_call.1']
    #allocation4 [shape = 's32[1]{0}', space=sflag, size = 0x4, scoped, tag = 'scoped memory for tpu_custom_call.1']
    #allocation5 [shape = 'u8[4096]{0}', space=vmem, size = 0x1000, scoped, tag = 'input window, operand 1, single buffered']
    #allocation6 [shape = 's32[1]{0}', space=sflag, size = 0x4, scoped, tag = 'scoped memory for tpu_custom_call.1']
    #allocation7 [shape = 'u8[32768]{0}', space=vmem, size = 0x8000, scoped, tag = 'input window, operand 2, single buffered']
    #allocation8 [shape = 'u8[32768]{0}', space=vmem, size = 0x8000, scoped, tag = 'input window, operand 3, single buffered']
    #allocation9 [shape = 's32[1]{0}', space=sflag, size = 0x4, scoped, tag = 'scoped memory for tpu_custom_call.1']
    #allocation10 [shape = 'u8[32768]{0}', space=vmem, size = 0x8000, scoped, tag = 'input window, operand 5, single buffered']
    #allocation11 [shape = 'u8[8192]{0}', space=vmem, size = 0x2000, scoped, tag = 'output window, operand 0, single buffered']
    %12 = vsyncpa [#allocation3], 0
    %13 = vsyncpa [#allocation6], 0
    %14 = vsyncpa [#allocation9], 0
    %15 = vsyncpa [#allocation4], 0
    // Predicated region
    $region2: #{tpu_custom_call.1} parent=1 // pred_check
      _
    $region3: #{tpu_custom_call.1} parent=1 // pred_check_branch
      %17 = sbr.rel (0) target = $region5
    $region4: #{tpu_custom_call.1} parent=1 // pred_region
      %s19 = ssub.s32 128, 128
      %20 = vsyncadd [#allocation3], %s19
      %s21 = sshll.u32 [#allocation2], 4
      %s22 = int_to_ptr.vmem [resolvable:$true] %s21
      %27 = dma.hbm_to_vmem [thread:$0]  %s0, 128, %s22, [#allocation3], 64, 64, 4
    $region5: #{tpu_custom_call.1} parent=1 // pred_fallthru
      _
    // Predicated region
    $region6: #{tpu_custom_call.1} parent=1 // pred_check
      _
    $region7: #{tpu_custom_call.1} parent=1 // pred_check_branch
      %29 = sbr.rel (0) target = $region9
    $region8: #{tpu_custom_call.1} parent=1 // pred_region
      %s31 = ssub.s32 128, 128
      %32 = vsyncadd [#allocation6], %s31
      %s33 = sshll.u32 [#allocation5], 4
      %s34 = int_to_ptr.vmem [resolvable:$true] %s33
      %39 = dma.hbm_to_vmem [thread:$0]  %s1, 128, %s34, [#allocation6], 64, 64, 4
    $region9: #{tpu_custom_call.1} parent=1 // pred_fallthru
      _
    // Predicated region
    $region10: #{tpu_custom_call.1} parent=1 // pred_check
      _
    $region11: #{tpu_custom_call.1} parent=1 // pred_check_branch
      %41 = sbr.rel (0) target = $region13
    $region12: #{tpu_custom_call.1} parent=1 // pred_region
      %s43 = ssub.s32 1024, 1024
      %44 = vsyncadd [#allocation6], %s43
      %s45 = sshll.u32 [#allocation7], 4
      %s46 = int_to_ptr.vmem [resolvable:$true] %s45
      %51 = dma.hbm_to_vmem [thread:$0]  %s2, 1024, %s46, [#allocation6], 64, 64, 4
    $region13: #{tpu_custom_call.1} parent=1 // pred_fallthru
      _
    // Predicated region
    $region14: #{tpu_custom_call.1} parent=1 // pred_check
      _
    $region15: #{tpu_custom_call.1} parent=1 // pred_check_branch
      %53 = sbr.rel (0) target = $region17
    $region16: #{tpu_custom_call.1} parent=1 // pred_region
      %s55 = ssub.s32 1024, 1024
      %56 = vsyncadd [#allocation9], %s55
      %s57 = sshll.u32 [#allocation8], 4
      %s58 = int_to_ptr.vmem [resolvable:$true] %s57
      %63 = dma.hbm_to_vmem [thread:$0]  %s3, 1024, %s58, [#allocation9], 64, 64, 4
    $region17: #{tpu_custom_call.1} parent=1 // pred_fallthru
      _
    // Predicated region
    $region18: #{tpu_custom_call.1} parent=1 // pred_check
      _
    $region19: #{tpu_custom_call.1} parent=1 // pred_check_branch
      %65 = sbr.rel (0) target = $region21
    $region20: #{tpu_custom_call.1} parent=1 // pred_region
      _
    $region21: #{tpu_custom_call.1} parent=1 // pred_fallthru
      _
    // Predicated region
    $region22: #{tpu_custom_call.1} parent=1 // pred_check
      _
    $region23: #{tpu_custom_call.1} parent=1 // pred_check_branch
      %67 = sbr.rel (0) target = $region25
    $region24: #{tpu_custom_call.1} parent=1 // pred_region
      %s69 = ssub.s32 1024, 1024
      %70 = vsyncadd [#allocation9], %s69
      %s71 = sshll.u32 [#allocation10], 4
      %s72 = int_to_ptr.vmem [resolvable:$true] %s71
      %77 = dma.hbm_to_vmem [thread:$0]  %s5, 1024, %s72, [#allocation9], 64, 64, 4
    $region25: #{tpu_custom_call.1} parent=1 // pred_fallthru
      _
    // Predicated region
    $region26: #{tpu_custom_call.1} parent=1 // pred_check
      _
    $region27: #{tpu_custom_call.1} parent=1 // pred_check_branch
      %79 = sbr.rel (0) target = $region29
    $region28: #{tpu_custom_call.1} parent=1 // pred_region
      _
    $region29: #{tpu_custom_call.1} parent=1 // pred_fallthru
      _
    // Predicated region
    $region30: #{tpu_custom_call.1} parent=1 // pred_check
      _
    $region31: #{tpu_custom_call.1} parent=1 // pred_check_branch
      %81 = sbr.rel (0) target = $region33
    $region32: #{tpu_custom_call.1} parent=1 // pred_region
      %82 = dma.done [#allocation3], 128
    $region33: #{tpu_custom_call.1} parent=1 // pred_fallthru
      _
    // Predicated region
    $region34: #{tpu_custom_call.1} parent=1 // pred_check
      _
    $region35: #{tpu_custom_call.1} parent=1 // pred_check_branch
      %84 = sbr.rel (0) target = $region37
    $region36: #{tpu_custom_call.1} parent=1 // pred_region
      %85 = dma.done [#allocation6], 128
    $region37: #{tpu_custom_call.1} parent=1 // pred_fallthru
      _
    // Predicated region
    $region38: #{tpu_custom_call.1} parent=1 // pred_check
      _
    $region39: #{tpu_custom_call.1} parent=1 // pred_check_branch
      %87 = sbr.rel (0) target = $region41
    $region40: #{tpu_custom_call.1} parent=1 // pred_region
      %88 = dma.done [#allocation6], 1024
    $region41: #{tpu_custom_call.1} parent=1 // pred_fallthru
      _
    // Predicated region
    $region42: #{tpu_custom_call.1} parent=1 // pred_check
      _
    $region43: #{tpu_custom_call.1} parent=1 // pred_check_branch
      %90 = sbr.rel (0) target = $region45
    $region44: #{tpu_custom_call.1} parent=1 // pred_region
      %91 = dma.done [#allocation9], 1024
    $region45: #{tpu_custom_call.1} parent=1 // pred_fallthru
      _
    // Predicated region
    $region46: #{tpu_custom_call.1} parent=1 // pred_check
      _
    $region47: #{tpu_custom_call.1} parent=1 // pred_check_branch
      %93 = sbr.rel (0) target = $region49
    $region48: #{tpu_custom_call.1} parent=1 // pred_region
      %94 = dma.done [#allocation9], 1024
    $region49: #{tpu_custom_call.1} parent=1 // pred_fallthru
      _
    %v96 = vld [vmem:[#allocation2] sm:$0xf]
    %v97 = vld [vmem:[#allocation2 + $0x4] sm:$0xf]
    %v98 = vld [vmem:[#allocation7] sm:$0xf]
    %v99 = vld [vmem:[#allocation7 + $0x4] sm:$0xf]
    %v100 = vld [vmem:[#allocation7 + $0x8] sm:$0xf]
    %v101 = vld [vmem:[#allocation7 + $0xc] sm:$0xf]
    %v102 = vld [vmem:[#allocation7 + $0x10] sm:$0xf]
    %v103 = vld [vmem:[#allocation7 + $0x14] sm:$0xf]
    %v104 = vld [vmem:[#allocation7 + $0x18] sm:$0xf]
    %v105 = vld [vmem:[#allocation7 + $0x1c] sm:$0xf]
    %v106 = vld [vmem:[#allocation7 + $0x20] sm:$0xf]
    %v107 = vld [vmem:[#allocation7 + $0x24] sm:$0xf]
    %v108 = vld [vmem:[#allocation7 + $0x28] sm:$0xf]
    %v109 = vld [vmem:[#allocation7 + $0x2c] sm:$0xf]
    %v110 = vld [vmem:[#allocation7 + $0x30] sm:$0xf]
    %v111 = vld [vmem:[#allocation7 + $0x34] sm:$0xf]
    %v112 = vld [vmem:[#allocation7 + $0x38] sm:$0xf]
    %v113 = vld [vmem:[#allocation7 + $0x3c] sm:$0xf]
    %v114 = vld [vmem:[#allocation5] sm:$0xf]
    %v115 = vld [vmem:[#allocation5 + $0x4] sm:$0xf]
    %v116 = vld [vmem:[#allocation8] sm:$0xf]
    %v117 = vld [vmem:[#allocation8 + $0x4] sm:$0xf]
    %v118 = vld [vmem:[#allocation8 + $0x8] sm:$0xf]
    %v119 = vld [vmem:[#allocation8 + $0xc] sm:$0xf]
    %v120 = vld [vmem:[#allocation8 + $0x10] sm:$0xf]
    %v121 = vld [vmem:[#allocation8 + $0x14] sm:$0xf]
    %v122 = vld [vmem:[#allocation8 + $0x18] sm:$0xf]
    %v123 = vld [vmem:[#allocation8 + $0x1c] sm:$0xf]
    %v124 = vld [vmem:[#allocation8 + $0x20] sm:$0xf]
    %v125 = vld [vmem:[#allocation8 + $0x24] sm:$0xf]
    %v126 = vld [vmem:[#allocation8 + $0x28] sm:$0xf]
    %v127 = vld [vmem:[#allocation8 + $0x2c] sm:$0xf]
    %v128 = vld [vmem:[#allocation8 + $0x30] sm:$0xf]
    %v129 = vld [vmem:[#allocation8 + $0x34] sm:$0xf]
    %v130 = vld [vmem:[#allocation8 + $0x38] sm:$0xf]
    %v131 = vld [vmem:[#allocation8 + $0x3c] sm:$0xf]
    %v134 = vunpack.c.l.b16 %v114
    %v135 = vunpack.c.l.b16 %v115
    %v136 = vpack.c.b16 %v135, %v134
    %v154 = vunpack.c.l.b16 %v116
    %v155 = vunpack.c.l.b16 %v117
    %v156 = vunpack.c.l.b16 %v118
    %v157 = vunpack.c.l.b16 %v119
    %v158 = vunpack.c.l.b16 %v120
    %v159 = vunpack.c.l.b16 %v121
    %v160 = vunpack.c.l.b16 %v122
    %v161 = vunpack.c.l.b16 %v123
    %v162 = vunpack.c.l.b16 %v124
    %v163 = vunpack.c.l.b16 %v125
    %v164 = vunpack.c.l.b16 %v126
    %v165 = vunpack.c.l.b16 %v127
    %v166 = vunpack.c.l.b16 %v128
    %v167 = vunpack.c.l.b16 %v129
    %v168 = vunpack.c.l.b16 %v130
    %v169 = vunpack.c.l.b16 %v131
    %v170 = vpack.c.b16 %v155, %v154
    %v171 = vpack.c.b16 %v157, %v156
    %v172 = vpack.c.b16 %v159, %v158
    %v173 = vpack.c.b16 %v161, %v160
    %v174 = vpack.c.b16 %v163, %v162
    %v175 = vpack.c.b16 %v165, %v164
    %v176 = vpack.c.b16 %v167, %v166
    %v177 = vpack.c.b16 %v169, %v168
    %186 = vmatprep.subr.bf16.mxu0 0
    %187 = vmatpush1.bf16.msra.mxu0 %v177
    %188 = vmatprep.subr.bf16.mxu0 0
    %189 = vmatpush1.bf16.msra.mxu0 %v176
    %190 = vmatprep.subr.bf16.mxu0 0
    %191 = vmatpush1.bf16.msra.mxu0 %v175
    %192 = vmatprep.subr.bf16.mxu0 0
    %193 = vmatpush1.bf16.msra.mxu0 %v174
    %194 = vmatprep.subr.bf16.mxu0 0
    %195 = vmatpush1.bf16.msra.mxu0 %v173
    %196 = vmatprep.subr.bf16.mxu0 0
    %197 = vmatpush1.bf16.msra.mxu0 %v172
    %198 = vmatprep.subr.bf16.mxu0 0
    %199 = vmatpush1.bf16.msra.mxu0 %v171
    %200 = vmatprep.subr.bf16.mxu0 0
    %201 = vmatpush1.bf16.msra.mxu0 %v170
    %202 = vmatprep.subr.bf16.mxu0 0
    %203 = vmatpush2.bf16.msra.mxu0 0
    %204 = vmatprep.subr.bf16.mxu0 0
    %205 = vmatpush2.bf16.msra.mxu0 0
    %206 = vmatprep.subr.bf16.mxu0 0
    %207 = vmatpush2.bf16.msra.mxu0 0
    %208 = vmatprep.subr.bf16.mxu0 0
    %209 = vmatpush2.bf16.msra.mxu0 0
    %210 = vmatprep.subr.bf16.mxu0 0
    %211 = vmatpush2.bf16.msra.mxu0 0
    %212 = vmatprep.subr.bf16.mxu0 0
    %213 = vmatpush2.bf16.msra.mxu0 0
    %214 = vmatprep.subr.bf16.mxu0 0
    %215 = vmatpush2.bf16.msra.mxu0 0
    %216 = vmatprep.subr.bf16.mxu0 0
    %217 = vmatpush2.bf16.msra.mxu0 0
    %218 = vmatprep.mubr.bf16.mxu0 0
    %219 = vmatmul.mubr.bf16.gmra.mxu0 %v136
    %v220 = vpop.f32.mrf.mxu0
    %v221 = vadd.f32 0.0, %v220
    %v222 = vpop.f32.mrf.mxu0
    %v223 = vpop.f32.mrf.mxu0
    %v224 = vadd.f32 0.0, %v223
    %v225 = vpop.f32.mrf.mxu0
    %226 = vdwg.mxu0
    %v229 = vunpack.c.l.b16 %v96
    %v230 = vunpack.c.l.b16 %v97
    %v231 = vpack.c.b16 %v230, %v229
    %v249 = vunpack.c.l.b16 %v98
    %v250 = vunpack.c.l.b16 %v99
    %v251 = vunpack.c.l.b16 %v100
    %v252 = vunpack.c.l.b16 %v101
    %v253 = vunpack.c.l.b16 %v102
    %v254 = vunpack.c.l.b16 %v103
    %v255 = vunpack.c.l.b16 %v104
    %v256 = vunpack.c.l.b16 %v105
    %v257 = vunpack.c.l.b16 %v106
    %v258 = vunpack.c.l.b16 %v107
    %v259 = vunpack.c.l.b16 %v108
    %v260 = vunpack.c.l.b16 %v109
    %v261 = vunpack.c.l.b16 %v110
    %v262 = vunpack.c.l.b16 %v111
    %v263 = vunpack.c.l.b16 %v112
    %v264 = vunpack.c.l.b16 %v113
    %v265 = vpack.c.b16 %v250, %v249
    %v266 = vpack.c.b16 %v252, %v251
    %v267 = vpack.c.b16 %v254, %v253
    %v268 = vpack.c.b16 %v256, %v255
    %v269 = vpack.c.b16 %v258, %v257
    %v270 = vpack.c.b16 %v260, %v259
    %v271 = vpack.c.b16 %v262, %v261
    %v272 = vpack.c.b16 %v264, %v263
    %281 = vmatprep.subr.bf16.mxu0 0
    %282 = vmatpush1.bf16.msra.mxu0 %v272
    %283 = vmatprep.subr.bf16.mxu0 0
    %284 = vmatpush1.bf16.msra.mxu0 %v271
    %285 = vmatprep.subr.bf16.mxu0 0
    %286 = vmatpush1.bf16.msra.mxu0 %v270
    %287 = vmatprep.subr.bf16.mxu0 0
    %288 = vmatpush1.bf16.msra.mxu0 %v269
    %289 = vmatprep.subr.bf16.mxu0 0
    %290 = vmatpush1.bf16.msra.mxu0 %v268
    %291 = vmatprep.subr.bf16.mxu0 0
    %292 = vmatpush1.bf16.msra.mxu0 %v267
    %293 = vmatprep.subr.bf16.mxu0 0
    %294 = vmatpush1.bf16.msra.mxu0 %v266
    %295 = vmatprep.subr.bf16.mxu0 0
    %296 = vmatpush1.bf16.msra.mxu0 %v265
    %297 = vmatprep.subr.bf16.mxu0 0
    %298 = vmatpush2.bf16.msra.mxu0 0
    %299 = vmatprep.subr.bf16.mxu0 0
    %300 = vmatpush2.bf16.msra.mxu0 0
    %301 = vmatprep.subr.bf16.mxu0 0
    %302 = vmatpush2.bf16.msra.mxu0 0
    %303 = vmatprep.subr.bf16.mxu0 0
    %304 = vmatpush2.bf16.msra.mxu0 0
    %305 = vmatprep.subr.bf16.mxu0 0
    %306 = vmatpush2.bf16.msra.mxu0 0
    %307 = vmatprep.subr.bf16.mxu0 0
    %308 = vmatpush2.bf16.msra.mxu0 0
    %309 = vmatprep.subr.bf16.mxu0 0
    %310 = vmatpush2.bf16.msra.mxu0 0
    %311 = vmatprep.subr.bf16.mxu0 0
    %312 = vmatpush2.bf16.msra.mxu0 0
    %313 = vmatprep.mubr.bf16.mxu0 0
    %314 = vmatmul.mubr.bf16.gmra.mxu0 %v231
    %v315 = vpop.f32.mrf.mxu0
    %v316 = vadd.f32 %v221, %v315
    %v317 = vpop.f32.mrf.mxu0
    %v318 = vpop.f32.mrf.mxu0
    %v319 = vadd.f32 %v224, %v318
    %v320 = vpop.f32.mrf.mxu0
    %321 = vdwg.mxu0
    %v322 = vld [vmem:[%s4] sm:$0x1]
    %v324 = vlaneseq
    %v325 = vshrl.u32 %v324, 7
    %v326 = vsub.s32 0, %v325
    %v327 = vrot.slane %v322, %v326
    %v329 = vadd.f32 %v316, %v327
    %v330 = vadd.f32 %v319, %v327
    %v331 = vmax.f32 %v329, 0.0
    %v332 = vmax.f32 %v330, 0.0
    %v333 = vpack.c.bf16 %v332, %v331
    %v334 = vld [vmem:[#allocation10] sm:$0xf]
    %v335 = vld [vmem:[#allocation10 + $0x4] sm:$0xf]
    %v336 = vld [vmem:[#allocation10 + $0x8] sm:$0xf]
    %v337 = vld [vmem:[#allocation10 + $0xc] sm:$0xf]
    %v338 = vld [vmem:[#allocation10 + $0x10] sm:$0xf]
    %v339 = vld [vmem:[#allocation10 + $0x14] sm:$0xf]
    %v340 = vld [vmem:[#allocation10 + $0x18] sm:$0xf]
    %v341 = vld [vmem:[#allocation10 + $0x1c] sm:$0xf]
    %v342 = vld [vmem:[#allocation10 + $0x20] sm:$0xf]
    %v343 = vld [vmem:[#allocation10 + $0x24] sm:$0xf]
    %v344 = vld [vmem:[#allocation10 + $0x28] sm:$0xf]
    %v345 = vld [vmem:[#allocation10 + $0x2c] sm:$0xf]
    %v346 = vld [vmem:[#allocation10 + $0x30] sm:$0xf]
    %v347 = vld [vmem:[#allocation10 + $0x34] sm:$0xf]
    %v348 = vld [vmem:[#allocation10 + $0x38] sm:$0xf]
    %v349 = vld [vmem:[#allocation10 + $0x3c] sm:$0xf]
    %v350 = vld [vmem:[%s6] sm:$0x1]
    %v352 = vlaneseq
    %v353 = vshrl.u32 %v352, 7
    %v354 = vsub.s32 0, %v353
    %v355 = vrot.slane %v350, %v354
    %v373 = vunpack.c.l.b16 %v334
    %v374 = vunpack.c.l.b16 %v335
    %v375 = vunpack.c.l.b16 %v336
    %v376 = vunpack.c.l.b16 %v337
    %v377 = vunpack.c.l.b16 %v338
    %v378 = vunpack.c.l.b16 %v339
    %v379 = vunpack.c.l.b16 %v340
    %v380 = vunpack.c.l.b16 %v341
    %v381 = vunpack.c.l.b16 %v342
    %v382 = vunpack.c.l.b16 %v343
    %v383 = vunpack.c.l.b16 %v344
    %v384 = vunpack.c.l.b16 %v345
    %v385 = vunpack.c.l.b16 %v346
    %v386 = vunpack.c.l.b16 %v347
    %v387 = vunpack.c.l.b16 %v348
    %v388 = vunpack.c.l.b16 %v349
    %v389 = vpack.c.b16 %v374, %v373
    %v390 = vpack.c.b16 %v376, %v375
    %v391 = vpack.c.b16 %v378, %v377
    %v392 = vpack.c.b16 %v380, %v379
    %v393 = vpack.c.b16 %v382, %v381
    %v394 = vpack.c.b16 %v384, %v383
    %v395 = vpack.c.b16 %v386, %v385
    %v396 = vpack.c.b16 %v388, %v387
    %405 = vmatprep.subr.bf16.mxu0 0
    %406 = vmatpush1.bf16.msra.mxu0 %v396
    %407 = vmatprep.subr.bf16.mxu0 0
    %408 = vmatpush1.bf16.msra.mxu0 %v395
    %409 = vmatprep.subr.bf16.mxu0 0
    %410 = vmatpush1.bf16.msra.mxu0 %v394
    %411 = vmatprep.subr.bf16.mxu0 0
    %412 = vmatpush1.bf16.msra.mxu0 %v393
    %413 = vmatprep.subr.bf16.mxu0 0
    %414 = vmatpush1.bf16.msra.mxu0 %v392
    %415 = vmatprep.subr.bf16.mxu0 0
    %416 = vmatpush1.bf16.msra.mxu0 %v391
    %417 = vmatprep.subr.bf16.mxu0 0
    %418 = vmatpush1.bf16.msra.mxu0 %v390
    %419 = vmatprep.subr.bf16.mxu0 0
    %420 = vmatpush1.bf16.msra.mxu0 %v389
    %421 = vmatprep.subr.bf16.mxu0 0
    %422 = vmatpush2.bf16.msra.mxu0 0
    %423 = vmatprep.subr.bf16.mxu0 0
    %424 = vmatpush2.bf16.msra.mxu0 0
    %425 = vmatprep.subr.bf16.mxu0 0
    %426 = vmatpush2.bf16.msra.mxu0 0
    %427 = vmatprep.subr.bf16.mxu0 0
    %428 = vmatpush2.bf16.msra.mxu0 0
    %429 = vmatprep.subr.bf16.mxu0 0
    %430 = vmatpush2.bf16.msra.mxu0 0
    %431 = vmatprep.subr.bf16.mxu0 0
    %432 = vmatpush2.bf16.msra.mxu0 0
    %433 = vmatprep.subr.bf16.mxu0 0
    %434 = vmatpush2.bf16.msra.mxu0 0
    %435 = vmatprep.subr.bf16.mxu0 0
    %436 = vmatpush2.bf16.msra.mxu0 0
    %437 = vmatprep.mubr.bf16.mxu0 0
    %438 = vmatmul.mubr.bf16.gmra.mxu0 %v333
    %v439 = vpop.f32.mrf.mxu0
    %v440 = vadd.f32 %v355, %v439
    %v441 = vpop.f32.mrf.mxu0
    %v442 = vpop.f32.mrf.mxu0
    %v443 = vadd.f32 %v355, %v442
    %v444 = vpop.f32.mrf.mxu0
    %445 = vdwg.mxu0
    %446 = vst [vmem:[#allocation11] sm:$0xff] %v440
    %447 = vst [vmem:[#allocation11 + $0x8] sm:$0xff] %v443
    // Predicated region
    $region50: #{tpu_custom_call.1} parent=1 // pred_check
      _
    $region51: #{tpu_custom_call.1} parent=1 // pred_check_branch
      %449 = sbr.rel (0) target = $region53
    $region52: #{tpu_custom_call.1} parent=1 // pred_region
      %s451 = ssub.s32 256, 256
      %452 = vsyncadd [#allocation4], %s451
      %s453 = sshll.u32 [#allocation11], 4
      %s454 = int_to_ptr.vmem [resolvable:$true] %s453
      %459 = dma.vmem_to_hbm [thread:$0]  %s454, 256, %s7, [#allocation4], 128, 128, 8
    $region53: #{tpu_custom_call.1} parent=1 // pred_fallthru
      _
    // Predicated region
    $region54: #{tpu_custom_call.1} parent=1 // pred_check
      _
    $region55: #{tpu_custom_call.1} parent=1 // pred_check_branch
      %461 = sbr.rel (0) target = $region57
    $region56: #{tpu_custom_call.1} parent=1 // pred_region
      %462 = dma.done [#allocation4], 256
    $region57: #{tpu_custom_call.1} parent=1 // pred_fallthru
      _
    %463 = vsyncpa [#allocation3], 1
    %464 = vsyncpa [#allocation6], 1
    %465 = vsyncpa [#allocation9], 1
    %466 = vsyncpa [#allocation4], 1

// kernel: tpu_custom_call.1
$region0: #{tpu_custom_call.1}
  #allocation0 [shape = 'u32[]', space=smem, size = 0x4, offset = 0x4, fixed_abs, tag = 'smem constant byte address 0x4 - core index']
  #allocation1 [shape = 'u32[144,128]{1,0:T(1,128)}', space=vmem, size = 0x12000, scoped, tag = 'internal scratch']
  %s0 = inlined_call_operand.hbm [shape: bf16[16,128], index: 0, kind: input, shape index: {}]
  %s1 = inlined_call_operand.hbm [shape: bf16[16,128], index: 1, kind: input, shape index: {}]
  %s2 = inlined_call_operand.hbm [shape: bf16[128,128], index: 2, kind: input, shape index: {}]
  %s3 = inlined_call_operand.hbm [shape: bf16[128,128], index: 3, kind: input, shape index: {}]
  %s4 = inlined_call_operand.vmem [shape: f32[1,128], index: 4, kind: input, shape index: {}]
  %s5 = inlined_call_operand.hbm [shape: bf16[128,128], index: 5, kind: input, shape index: {}]
  %s6 = inlined_call_operand.vmem [shape: f32[1,128], index: 6, kind: input, shape index: {}]
  %s7 = inlined_call_operand.hbm [shape: f32[16,128], index: 7, kind: output, shape index: {}]
  %s8 = sld [smem:[#allocation0]]
  $region58: #{tpu_custom_call.1} parent=0
    _
  %s10 = ssub.s32 1, %s8
  %s11 = scalar_select 0, %s10, %s8
  $region1: #{tpu_custom_call.1} parent=0
    #allocation2 [shape = 'u8[4096]{0}', space=vmem, size = 0x1000, scoped, tag = 'input window, operand 0, single buffered']
    #allocation3 [shape = 's32[1]{0}', space=sflag, size = 0x4, scoped, tag = 'scoped memory for tpu_custom_call.1']
    #allocation4 [shape = 's32[1]{0}', space=sflag, size = 0x4, scoped, tag = 'scoped memory for tpu_custom_call.1']
    #allocation5 [shape = 'u8[4096]{0}', space=vmem, size = 0x1000, scoped, tag = 'input window, operand 1, single buffered']
    #allocation6 [shape = 's32[1]{0}', space=sflag, size = 0x4, scoped, tag = 'scoped memory for tpu_custom_call.1']
    #allocation7 [shape = 'u8[32768]{0}', space=vmem, size = 0x8000, scoped, tag = 'input window, operand 2, single buffered']
    #allocation8 [shape = 'u8[32768]{0}', space=vmem, size = 0x8000, scoped, tag = 'input window, operand 3, single buffered']
    #allocation9 [shape = 's32[1]{0}', space=sflag, size = 0x4, scoped, tag = 'scoped memory for tpu_custom_call.1']
    #allocation10 [shape = 'u8[32768]{0}', space=vmem, size = 0x8000, scoped, tag = 'input window, operand 5, single buffered']
    #allocation11 [shape = 'u8[8192]{0}', space=vmem, size = 0x2000, scoped, tag = 'output window, operand 0, single buffered']
    %12 = vsyncpa [#allocation3], 0
    %13 = vsyncpa [#allocation6], 0
    %14 = vsyncpa [#allocation9], 0
    %15 = vsyncpa [#allocation4], 0
    // Predicated region
    $region2: #{tpu_custom_call.1} parent=1 // pred_check
      _
    $region3: #{tpu_custom_call.1} parent=1 // pred_check_branch
      %17 = sbr.rel (0) target = $region5
    $region4: #{tpu_custom_call.1} parent=1 // pred_region
      %s19 = ssub.s32 128, 128
      %20 = vsyncadd [#allocation3], %s19
      %s21 = sshll.u32 [#allocation2], 4
      %s22 = int_to_ptr.vmem [resolvable:$true] %s21
      %27 = dma.hbm_to_vmem [thread:$0]  %s0, 128, %s22, [#allocation3], 64, 64, 4
    $region5: #{tpu_custom_call.1} parent=1 // pred_fallthru
      _
    // Predicated region
    $region6: #{tpu_custom_call.1} parent=1 // pred_check
      _
    $region7: #{tpu_custom_call.1} parent=1 // pred_check_branch
      %29 = sbr.rel (0) target = $region9
    $region8: #{tpu_custom_call.1} parent=1 // pred_region
      %s31 = ssub.s32 128, 128
      %32 = vsyncadd [#allocation6], %s31
      %s33 = sshll.u32 [#allocation5], 4
      %s34 = int_to_ptr.vmem [resolvable:$true] %s33
      %39 = dma.hbm_to_vmem [thread:$0]  %s1, 128, %s34, [#allocation6], 64, 64, 4
    $region9: #{tpu_custom_call.1} parent=1 // pred_fallthru
      _
    // Predicated region
    $region10: #{tpu_custom_call.1} parent=1 // pred_check
      _
    $region11: #{tpu_custom_call.1} parent=1 // pred_check_branch
      %41 = sbr.rel (0) target = $region13
    $region12: #{tpu_custom_call.1} parent=1 // pred_region
      %s43 = ssub.s32 1024, 1024
      %44 = vsyncadd [#allocation6], %s43
      %s45 = sshll.u32 [#allocation7], 4
      %s46 = int_to_ptr.vmem [resolvable:$true] %s45
      %51 = dma.hbm_to_vmem [thread:$0]  %s2, 1024, %s46, [#allocation6], 64, 64, 4
    $region13: #{tpu_custom_call.1} parent=1 // pred_fallthru
      _
    // Predicated region
    $region14: #{tpu_custom_call.1} parent=1 // pred_check
      _
    $region15: #{tpu_custom_call.1} parent=1 // pred_check_branch
      %53 = sbr.rel (0) target = $region17
    $region16: #{tpu_custom_call.1} parent=1 // pred_region
      %s55 = ssub.s32 1024, 1024
      %56 = vsyncadd [#allocation9], %s55
      %s57 = sshll.u32 [#allocation8], 4
      %s58 = int_to_ptr.vmem [resolvable:$true] %s57
      %63 = dma.hbm_to_vmem [thread:$0]  %s3, 1024, %s58, [#allocation9], 64, 64, 4
    $region17: #{tpu_custom_call.1} parent=1 // pred_fallthru
      _
    // Predicated region
    $region18: #{tpu_custom_call.1} parent=1 // pred_check
      _
    $region19: #{tpu_custom_call.1} parent=1 // pred_check_branch
      %65 = sbr.rel (0) target = $region21
    $region20: #{tpu_custom_call.1} parent=1 // pred_region
      _
    $region21: #{tpu_custom_call.1} parent=1 // pred_fallthru
      _
    // Predicated region
    $region22: #{tpu_custom_call.1} parent=1 // pred_check
      _
    $region23: #{tpu_custom_call.1} parent=1 // pred_check_branch
      %67 = sbr.rel (0) target = $region25
    $region24: #{tpu_custom_call.1} parent=1 // pred_region
      %s69 = ssub.s32 1024, 1024
      %70 = vsyncadd [#allocation9], %s69
      %s71 = sshll.u32 [#allocation10], 4
      %s72 = int_to_ptr.vmem [resolvable:$true] %s71
      %77 = dma.hbm_to_vmem [thread:$0]  %s5, 1024, %s72, [#allocation9], 64, 64, 4
    $region25: #{tpu_custom_call.1} parent=1 // pred_fallthru
      _
    // Predicated region
    $region26: #{tpu_custom_call.1} parent=1 // pred_check
      _
    $region27: #{tpu_custom_call.1} parent=1 // pred_check_branch
      %79 = sbr.rel (0) target = $region29
    $region28: #{tpu_custom_call.1} parent=1 // pred_region
      _
    $region29: #{tpu_custom_call.1} parent=1 // pred_fallthru
      _
    // Predicated region
    $region30: #{tpu_custom_call.1} parent=1 // pred_check
      _
    $region31: #{tpu_custom_call.1} parent=1 // pred_check_branch
      %81 = sbr.rel (0) target = $region33
    $region32: #{tpu_custom_call.1} parent=1 // pred_region
      %82 = dma.done [#allocation3], 128
    $region33: #{tpu_custom_call.1} parent=1 // pred_fallthru
      _
    // Predicated region
    $region34: #{tpu_custom_call.1} parent=1 // pred_check
      _
    $region35: #{tpu_custom_call.1} parent=1 // pred_check_branch
      %84 = sbr.rel (0) target = $region37
    $region36: #{tpu_custom_call.1} parent=1 // pred_region
      %85 = dma.done [#allocation6], 128
    $region37: #{tpu_custom_call.1} parent=1 // pred_fallthru
      _
    // Predicated region
    $region38: #{tpu_custom_call.1} parent=1 // pred_check
      _
    $region39: #{tpu_custom_call.1} parent=1 // pred_check_branch
      %87 = sbr.rel (0) target = $region41
    $region40: #{tpu_custom_call.1} parent=1 // pred_region
      %88 = dma.done [#allocation6], 1024
    $region41: #{tpu_custom_call.1} parent=1 // pred_fallthru
      _
    // Predicated region
    $region42: #{tpu_custom_call.1} parent=1 // pred_check
      _
    $region43: #{tpu_custom_call.1} parent=1 // pred_check_branch
      %90 = sbr.rel (0) target = $region45
    $region44: #{tpu_custom_call.1} parent=1 // pred_region
      %91 = dma.done [#allocation9], 1024
    $region45: #{tpu_custom_call.1} parent=1 // pred_fallthru
      _
    // Predicated region
    $region46: #{tpu_custom_call.1} parent=1 // pred_check
      _
    $region47: #{tpu_custom_call.1} parent=1 // pred_check_branch
      %93 = sbr.rel (0) target = $region49
    $region48: #{tpu_custom_call.1} parent=1 // pred_region
      %94 = dma.done [#allocation9], 1024
    $region49: #{tpu_custom_call.1} parent=1 // pred_fallthru
      _
    %v96 = vld [vmem:[#allocation2] sm:$0xf]
    %v97 = vld [vmem:[#allocation2 + $0x4] sm:$0xf]
    %v98 = vld [vmem:[#allocation7] sm:$0xf]
    %v99 = vld [vmem:[#allocation7 + $0x4] sm:$0xf]
    %v100 = vld [vmem:[#allocation7 + $0x8] sm:$0xf]
    %v101 = vld [vmem:[#allocation7 + $0xc] sm:$0xf]
    %v102 = vld [vmem:[#allocation7 + $0x10] sm:$0xf]
    %v103 = vld [vmem:[#allocation7 + $0x14] sm:$0xf]
    %v104 = vld [vmem:[#allocation7 + $0x18] sm:$0xf]
    %v105 = vld [vmem:[#allocation7 + $0x1c] sm:$0xf]
    %v106 = vld [vmem:[#allocation7 + $0x20] sm:$0xf]
    %v107 = vld [vmem:[#allocation7 + $0x24] sm:$0xf]
    %v108 = vld [vmem:[#allocation7 + $0x28] sm:$0xf]
    %v109 = vld [vmem:[#allocation7 + $0x2c] sm:$0xf]
    %v110 = vld [vmem:[#allocation7 + $0x30] sm:$0xf]
    %v111 = vld [vmem:[#allocation7 + $0x34] sm:$0xf]
    %v112 = vld [vmem:[#allocation7 + $0x38] sm:$0xf]
    %v113 = vld [vmem:[#allocation7 + $0x3c] sm:$0xf]
    %v114 = vld [vmem:[#allocation5] sm:$0xf]
    %v115 = vld [vmem:[#allocation5 + $0x4] sm:$0xf]
    %v116 = vld [vmem:[#allocation8] sm:$0xf]
    %v117 = vld [vmem:[#allocation8 + $0x4] sm:$0xf]
    %v118 = vld [vmem:[#allocation8 + $0x8] sm:$0xf]
    %v119 = vld [vmem:[#allocation8 + $0xc] sm:$0xf]
    %v120 = vld [vmem:[#allocation8 + $0x10] sm:$0xf]
    %v121 = vld [vmem:[#allocation8 + $0x14] sm:$0xf]
    %v122 = vld [vmem:[#allocation8 + $0x18] sm:$0xf]
    %v123 = vld [vmem:[#allocation8 + $0x1c] sm:$0xf]
    %v124 = vld [vmem:[#allocation8 + $0x20] sm:$0xf]
    %v125 = vld [vmem:[#allocation8 + $0x24] sm:$0xf]
    %v126 = vld [vmem:[#allocation8 + $0x28] sm:$0xf]
    %v127 = vld [vmem:[#allocation8 + $0x2c] sm:$0xf]
    %v128 = vld [vmem:[#allocation8 + $0x30] sm:$0xf]
    %v129 = vld [vmem:[#allocation8 + $0x34] sm:$0xf]
    %v130 = vld [vmem:[#allocation8 + $0x38] sm:$0xf]
    %v131 = vld [vmem:[#allocation8 + $0x3c] sm:$0xf]
    %v134 = vunpack.c.l.b16 %v114
    %v135 = vunpack.c.l.b16 %v115
    %v136 = vpack.c.b16 %v135, %v134
    %v154 = vunpack.c.l.b16 %v116
    %v155 = vunpack.c.l.b16 %v117
    %v156 = vunpack.c.l.b16 %v118
    %v157 = vunpack.c.l.b16 %v119
    %v158 = vunpack.c.l.b16 %v120
    %v159 = vunpack.c.l.b16 %v121
    %v160 = vunpack.c.l.b16 %v122
    %v161 = vunpack.c.l.b16 %v123
    %v162 = vunpack.c.l.b16 %v124
    %v163 = vunpack.c.l.b16 %v125
    %v164 = vunpack.c.l.b16 %v126
    %v165 = vunpack.c.l.b16 %v127
    %v166 = vunpack.c.l.b16 %v128
    %v167 = vunpack.c.l.b16 %v129
    %v168 = vunpack.c.l.b16 %v130
    %v169 = vunpack.c.l.b16 %v131
    %v170 = vpack.c.b16 %v155, %v154
    %v171 = vpack.c.b16 %v157, %v156
    %v172 = vpack.c.b16 %v159, %v158
    %v173 = vpack.c.b16 %v161, %v160
    %v174 = vpack.c.b16 %v163, %v162
    %v175 = vpack.c.b16 %v165, %v164
    %v176 = vpack.c.b16 %v167, %v166
    %v177 = vpack.c.b16 %v169, %v168
    %186 = vmatprep.subr.bf16.mxu0 0
    %187 = vmatpush1.bf16.msra.mxu0 %v177
    %188 = vmatprep.subr.bf16.mxu0 0
    %189 = vmatpush1.bf16.msra.mxu0 %v176
    %190 = vmatprep.subr.bf16.mxu0 0
    %191 = vmatpush1.bf16.msra.mxu0 %v175
    %192 = vmatprep.subr.bf16.mxu0 0
    %193 = vmatpush1.bf16.msra.mxu0 %v174
    %194 = vmatprep.subr.bf16.mxu0 0
    %195 = vmatpush1.bf16.msra.mxu0 %v173
    %196 = vmatprep.subr.bf16.mxu0 0
    %197 = vmatpush1.bf16.msra.mxu0 %v172
    %198 = vmatprep.subr.bf16.mxu0 0
    %199 = vmatpush1.bf16.msra.mxu0 %v171
    %200 = vmatprep.subr.bf16.mxu0 0
    %201 = vmatpush1.bf16.msra.mxu0 %v170
    %202 = vmatprep.subr.bf16.mxu0 0
    %203 = vmatpush2.bf16.msra.mxu0 0
    %204 = vmatprep.subr.bf16.mxu0 0
    %205 = vmatpush2.bf16.msra.mxu0 0
    %206 = vmatprep.subr.bf16.mxu0 0
    %207 = vmatpush2.bf16.msra.mxu0 0
    %208 = vmatprep.subr.bf16.mxu0 0
    %209 = vmatpush2.bf16.msra.mxu0 0
    %210 = vmatprep.subr.bf16.mxu0 0
    %211 = vmatpush2.bf16.msra.mxu0 0
    %212 = vmatprep.subr.bf16.mxu0 0
    %213 = vmatpush2.bf16.msra.mxu0 0
    %214 = vmatprep.subr.bf16.mxu0 0
    %215 = vmatpush2.bf16.msra.mxu0 0
    %216 = vmatprep.subr.bf16.mxu0 0
    %217 = vmatpush2.bf16.msra.mxu0 0
    %218 = vmatprep.mubr.bf16.mxu0 0
    %219 = vmatmul.mubr.bf16.gmra.mxu0 %v136
    %v220 = vpop.f32.mrf.mxu0
    %v221 = vadd.f32 0.0, %v220
    %v222 = vpop.f32.mrf.mxu0
    %v223 = vpop.f32.mrf.mxu0
    %v224 = vadd.f32 0.0, %v223
    %v225 = vpop.f32.mrf.mxu0
    %226 = vdwg.mxu0
    %v229 = vunpack.c.l.b16 %v96
    %v230 = vunpack.c.l.b16 %v97
    %v231 = vpack.c.b16 %v230, %v229
    %v249 = vunpack.c.l.b16 %v98
    %v250 = vunpack.c.l.b16 %v99
    %v251 = vunpack.c.l.b16 %v100
    %v252 = vunpack.c.l.b16 %v101
    %v253 = vunpack.c.l.b16 %v102
    %v254 = vunpack.c.l.b16 %v103
    %v255 = vunpack.c.l.b16 %v104
    %v256 = vunpack.c.l.b16 %v105
    %v257 = vunpack.c.l.b16 %v106
    %v258 = vunpack.c.l.b16 %v107
    %v259 = vunpack.c.l.b16 %v108
    %v260 = vunpack.c.l.b16 %v109
    %v261 = vunpack.c.l.b16 %v110
    %v262 = vunpack.c.l.b16 %v111
    %v263 = vunpack.c.l.b16 %v112
    %v264 = vunpack.c.l.b16 %v113
    %v265 = vpack.c.b16 %v250, %v249
    %v266 = vpack.c.b16 %v252, %v251
    %v267 = vpack.c.b16 %v254, %v253
    %v268 = vpack.c.b16 %v256, %v255
    %v269 = vpack.c.b16 %v258, %v257
    %v270 = vpack.c.b16 %v260, %v259
    %v271 = vpack.c.b16 %v262, %v261
    %v272 = vpack.c.b16 %v264, %v263
    %281 = vmatprep.subr.bf16.mxu0 0
    %282 = vmatpush1.bf16.msra.mxu0 %v272
    %283 = vmatprep.subr.bf16.mxu0 0
    %284 = vmatpush1.bf16.msra.mxu0 %v271
    %285 = vmatprep.subr.bf16.mxu0 0
    %286 = vmatpush1.bf16.msra.mxu0 %v270
    %287 = vmatprep.subr.bf16.mxu0 0
    %288 = vmatpush1.bf16.msra.mxu0 %v269
    %289 = vmatprep.subr.bf16.mxu0 0
    %290 = vmatpush1.bf16.msra.mxu0 %v268
    %291 = vmatprep.subr.bf16.mxu0 0
    %292 = vmatpush1.bf16.msra.mxu0 %v267
    %293 = vmatprep.subr.bf16.mxu0 0
    %294 = vmatpush1.bf16.msra.mxu0 %v266
    %295 = vmatprep.subr.bf16.mxu0 0
    %296 = vmatpush1.bf16.msra.mxu0 %v265
    %297 = vmatprep.subr.bf16.mxu0 0
    %298 = vmatpush2.bf16.msra.mxu0 0
    %299 = vmatprep.subr.bf16.mxu0 0
    %300 = vmatpush2.bf16.msra.mxu0 0
    %301 = vmatprep.subr.bf16.mxu0 0
    %302 = vmatpush2.bf16.msra.mxu0 0
    %303 = vmatprep.subr.bf16.mxu0 0
    %304 = vmatpush2.bf16.msra.mxu0 0
    %305 = vmatprep.subr.bf16.mxu0 0
    %306 = vmatpush2.bf16.msra.mxu0 0
    %307 = vmatprep.subr.bf16.mxu0 0
    %308 = vmatpush2.bf16.msra.mxu0 0
    %309 = vmatprep.subr.bf16.mxu0 0
    %310 = vmatpush2.bf16.msra.mxu0 0
    %311 = vmatprep.subr.bf16.mxu0 0
    %312 = vmatpush2.bf16.msra.mxu0 0
    %313 = vmatprep.mubr.bf16.mxu0 0
    %314 = vmatmul.mubr.bf16.gmra.mxu0 %v231
    %v315 = vpop.f32.mrf.mxu0
    %v316 = vadd.f32 %v221, %v315
    %v317 = vpop.f32.mrf.mxu0
    %v318 = vpop.f32.mrf.mxu0
    %v319 = vadd.f32 %v224, %v318
    %v320 = vpop.f32.mrf.mxu0
    %321 = vdwg.mxu0
    %v322 = vld [vmem:[%s4] sm:$0x1]
    %v324 = vlaneseq
    %v325 = vshrl.u32 %v324, 7
    %v326 = vsub.s32 0, %v325
    %v327 = vrot.slane %v322, %v326
    %v329 = vadd.f32 %v316, %v327
    %v330 = vadd.f32 %v319, %v327
    %v331 = vmax.f32 %v329, 0.0
    %v332 = vmax.f32 %v330, 0.0
    %v333 = vpack.c.bf16 %v332, %v331
    %v334 = vld [vmem:[#allocation10] sm:$0xf]
    %v335 = vld [vmem:[#allocation10 + $0x4] sm:$0xf]
    %v336 = vld [vmem:[#allocation10 + $0x8] sm:$0xf]
    %v337 = vld [vmem:[#allocation10 + $0xc] sm:$0xf]
    %v338 = vld [vmem:[#allocation10 + $0x10] sm:$0xf]
    %v339 = vld [vmem:[#allocation10 + $0x14] sm:$0xf]
    %v340 = vld [vmem:[#allocation10 + $0x18] sm:$0xf]
    %v341 = vld [vmem:[#allocation10 + $0x1c] sm:$0xf]
    %v342 = vld [vmem:[#allocation10 + $0x20] sm:$0xf]
    %v343 = vld [vmem:[#allocation10 + $0x24] sm:$0xf]
    %v344 = vld [vmem:[#allocation10 + $0x28] sm:$0xf]
    %v345 = vld [vmem:[#allocation10 + $0x2c] sm:$0xf]
    %v346 = vld [vmem:[#allocation10 + $0x30] sm:$0xf]
    %v347 = vld [vmem:[#allocation10 + $0x34] sm:$0xf]
    %v348 = vld [vmem:[#allocation10 + $0x38] sm:$0xf]
    %v349 = vld [vmem:[#allocation10 + $0x3c] sm:$0xf]
    %v350 = vld [vmem:[%s6] sm:$0x1]
    %v352 = vlaneseq
    %v353 = vshrl.u32 %v352, 7
    %v354 = vsub.s32 0, %v353
    %v355 = vrot.slane %v350, %v354
    %v373 = vunpack.c.l.b16 %v334
    %v374 = vunpack.c.l.b16 %v335
    %v375 = vunpack.c.l.b16 %v336
    %v376 = vunpack.c.l.b16 %v337
    %v377 = vunpack.c.l.b16 %v338
    %v378 = vunpack.c.l.b16 %v339
    %v379 = vunpack.c.l.b16 %v340
    %v380 = vunpack.c.l.b16 %v341
    %v381 = vunpack.c.l.b16 %v342
    %v382 = vunpack.c.l.b16 %v343
    %v383 = vunpack.c.l.b16 %v344
    %v384 = vunpack.c.l.b16 %v345
    %v385 = vunpack.c.l.b16 %v346
    %v386 = vunpack.c.l.b16 %v347
    %v387 = vunpack.c.l.b16 %v348
    %v388 = vunpack.c.l.b16 %v349
    %v389 = vpack.c.b16 %v374, %v373
    %v390 = vpack.c.b16 %v376, %v375
    %v391 = vpack.c.b16 %v378, %v377
    %v392 = vpack.c.b16 %v380, %v379
    %v393 = vpack.c.b16 %v382, %v381
    %v394 = vpack.c.b16 %v384, %v383
    %v395 = vpack.c.b16 %v386, %v385
    %v396 = vpack.c.b16 %v388, %v387
    %405 = vmatprep.subr.bf16.mxu0 0
    %406 = vmatpush1.bf16.msra.mxu0 %v396
    %407 = vmatprep.subr.bf16.mxu0 0
    %408 = vmatpush1.bf16.msra.mxu0 %v395
    %409 = vmatprep.subr.bf16.mxu0 0
    %410 = vmatpush1.bf16.msra.mxu0 %v394
    %411 = vmatprep.subr.bf16.mxu0 0
    %412 = vmatpush1.bf16.msra.mxu0 %v393
    %413 = vmatprep.subr.bf16.mxu0 0
    %414 = vmatpush1.bf16.msra.mxu0 %v392
    %415 = vmatprep.subr.bf16.mxu0 0
    %416 = vmatpush1.bf16.msra.mxu0 %v391
    %417 = vmatprep.subr.bf16.mxu0 0
    %418 = vmatpush1.bf16.msra.mxu0 %v390
    %419 = vmatprep.subr.bf16.mxu0 0
    %420 = vmatpush1.bf16.msra.mxu0 %v389
    %421 = vmatprep.subr.bf16.mxu0 0
    %422 = vmatpush2.bf16.msra.mxu0 0
    %423 = vmatprep.subr.bf16.mxu0 0
    %424 = vmatpush2.bf16.msra.mxu0 0
    %425 = vmatprep.subr.bf16.mxu0 0
    %426 = vmatpush2.bf16.msra.mxu0 0
    %427 = vmatprep.subr.bf16.mxu0 0
    %428 = vmatpush2.bf16.msra.mxu0 0
    %429 = vmatprep.subr.bf16.mxu0 0
    %430 = vmatpush2.bf16.msra.mxu0 0
    %431 = vmatprep.subr.bf16.mxu0 0
    %432 = vmatpush2.bf16.msra.mxu0 0
    %433 = vmatprep.subr.bf16.mxu0 0
    %434 = vmatpush2.bf16.msra.mxu0 0
    %435 = vmatprep.subr.bf16.mxu0 0
    %436 = vmatpush2.bf16.msra.mxu0 0
    %437 = vmatprep.mubr.bf16.mxu0 0
    %438 = vmatmul.mubr.bf16.gmra.mxu0 %v333
    %v439 = vpop.f32.mrf.mxu0
    %v440 = vadd.f32 %v355, %v439
    %v441 = vpop.f32.mrf.mxu0
    %v442 = vpop.f32.mrf.mxu0
    %v443 = vadd.f32 %v355, %v442
    %v444 = vpop.f32.mrf.mxu0
    %445 = vdwg.mxu0
    %446 = vst [vmem:[#allocation11] sm:$0xff] %v440
    %447 = vst [vmem:[#allocation11 + $0x8] sm:$0xff] %v443
    // Predicated region
    $region50: #{tpu_custom_call.1} parent=1 // pred_check
      _
    $region51: #{tpu_custom_call.1} parent=1 // pred_check_branch
      %449 = sbr.rel (0) target = $region53
    $region52: #{tpu_custom_call.1} parent=1 // pred_region
      %s451 = ssub.s32 256, 256
      %452 = vsyncadd [#allocation4], %s451
      %s453 = sshll.u32 [#allocation11], 4
      %s454 = int_to_ptr.vmem [resolvable:$true] %s453
      %459 = dma.vmem_to_hbm [thread:$0]  %s454, 256, %s7, [#allocation4], 128, 128, 8
    $region53: #{tpu_custom_call.1} parent=1 // pred_fallthru
      _
    // Predicated region
    $region54: #{tpu_custom_call.1} parent=1 // pred_check
      _
    $region55: #{tpu_custom_call.1} parent=1 // pred_check_branch
      %461 = sbr.rel (0) target = $region57
    $region56: #{tpu_custom_call.1} parent=1 // pred_region
      %462 = dma.done [#allocation4], 256
    $region57: #{tpu_custom_call.1} parent=1 // pred_fallthru
      _
    %463 = vsyncpa [#allocation3], 1
    %464 = vsyncpa [#allocation6], 1
    %465 = vsyncpa [#allocation9], 1
    %466 = vsyncpa [#allocation4], 1

</llo_original>
